<compile_context>
chip_gen: v6e
topology: v6e:2x2x1
jax: 0.10.0
libtpu: 0.0.40
codegen_flags: <defaults>
</compile_context>

<pallas_src>
import functools

import jax
import jax.numpy as jnp
from jax import lax
from jax.experimental import pallas as pl
from jax.experimental.pallas import tpu as pltpu

_LANES = 128
_BLOCK_ROWS = 8192   # (8192, 128) f32 block = 4 MiB per input per pipeline buffer
_ACC_ROWS = 64       # per-chunk / accumulator rows: (64, 128) f32 = 8 vregs
_NUM_SPLITS = 2      # leading "parallel" axis: 2 TCs on v7x, serial elsewhere


def _iou_partial_kernel(x_ref, y_ref, out_ref, acc_i_ref, acc_t_ref, *,
                        true_rows, block_rows, chunk_rows, steps_per_split):
    s = pl.program_id(0)          # split (core) index
    i = pl.program_id(1)          # streaming (reduction) step within the split
    num_chunks = block_rows // chunk_rows

    @pl.when(i == 0)
    def _():
        acc_i_ref[...] = jnp.zeros_like(acc_i_ref)
        acc_t_ref[...] = jnp.zeros_like(acc_t_ref)

    # Logical (unclamped) block id. The DMA index_map clamps it in-bounds; the
    # unclamped value decides masking, so rows past the true end of the array
    # (ragged tail of the last block, or a fully-duplicated clamped block) are
    # zeroed before they can contribute.
    b = s * steps_per_split + i
    block_start = b * block_rows
    needs_mask = block_start + block_rows > true_rows

    def run_chunks(masked):
        # fori_loop carries the running partials in vregs: steady state is
        # 2 vector loads + 4 VALU ops per (x, y) vreg pair, no vector stores.
        def body(c, carry):
            acc_i, acc_t = carry
            off = pl.multiple_of(c * chunk_rows, chunk_rows)
            xc = x_ref[pl.ds(off, chunk_rows), :].astype(jnp.float32)
            yc = y_ref[pl.ds(off, chunk_rows), :].astype(jnp.float32)
            if masked:
                rid = lax.broadcasted_iota(jnp.int32, (chunk_rows, _LANES), 0)
                valid = (block_start + off + rid) < true_rows
                xc = jnp.where(valid, xc, 0.0)
                yc = jnp.where(valid, yc, 0.0)
            return acc_i + xc * yc, acc_t + (xc + yc)

        zeros = jnp.zeros((chunk_rows, _LANES), jnp.float32)
        acc_i, acc_t = lax.fori_loop(0, num_chunks, body, (zeros, zeros))
        acc_i_ref[...] += acc_i       # tiny (chunk_rows, 128) RMW, once per block
        acc_t_ref[...] += acc_t

    # Tail-only masking: interior blocks take the cheap unmasked path.
    @pl.when(jnp.logical_not(needs_mask))
    def _():
        run_chunks(masked=False)

    @pl.when(needs_mask)
    def _():
        run_chunks(masked=True)

    @pl.when(i == pl.num_programs(1) - 1)
    def _():
        # One cross-sublane reduction per split; lane sums finish in the wrapper.
        inter_part = jnp.sum(acc_i_ref[...], axis=0, keepdims=True)   # (1, 128)
        total_part = jnp.sum(acc_t_ref[...], axis=0, keepdims=True)   # (1, 128)
        out_ref[0:1, 0:1, :] = inter_part.reshape(1, 1, _LANES)
        out_ref[0:1, 1:2, :] = total_part.reshape(1, 1, _LANES)


def iou_loss(inputs, targets, smooth=1.0):
    """Pallas TPU implementation of IoULoss.forward. Returns a scalar f32."""
    x = jnp.ravel(inputs)     # free reshape; keep the native dtype (no upcast)
    y = jnp.ravel(targets)
    n = x.shape[0]
    smooth = jnp.float32(smooth)

    rem = n % _LANES
    n_main = n - rem
    rows = n_main // _LANES

    # Ragged <128-element tail: tiny jnp partial sums instead of a full padded
    # copy of both inputs.
    if rem:
        xt = x[n_main:].astype(jnp.float32)
        yt = y[n_main:].astype(jnp.float32)
        tail_inter = jnp.sum(xt * yt)
        tail_total = jnp.sum(xt + yt)
    else:
        tail_inter = jnp.float32(0.0)
        tail_total = jnp.float32(0.0)

    if rows < 8:
        # Tiny input (< 1024 aligned elements): not worth a kernel launch.
        xm = x[:n_main].astype(jnp.float32)
        ym = y[:n_main].astype(jnp.float32)
        inter = jnp.sum(xm * ym) + tail_inter
        total = jnp.sum(xm + ym) + tail_total
        union = total - inter
        return 1.0 - (inter + smooth) / (union + smooth)

    x2 = x[:n_main].reshape(rows, _LANES)
    y2 = y[:n_main].reshape(rows, _LANES)

    # Big streaming blocks; small inputs use (almost) the full array as one
    # block, rounded down to a sublane multiple with the remainder masked.
    if rows >= _BLOCK_ROWS:
        block_rows = _BLOCK_ROWS                  # multiple of _ACC_ROWS
        chunk_rows = _ACC_ROWS
    else:
        block_rows = (rows // 8) * 8              # >= 8, multiple of 8
        chunk_rows = _ACC_ROWS if block_rows % _ACC_ROWS == 0 else 8

    total_blocks = pl.cdiv(rows, block_rows)
    num_splits = min(_NUM_SPLITS, total_blocks)   # no duplicated work for tiny inputs
    steps = pl.cdiv(total_blocks, num_splits)

    def in_index(s, i):
        # Clamp so the DMA never targets a block fully outside the array; the
        # kernel zeroes any duplicated coverage via the unclamped block id.
        return (jnp.minimum(s * steps + i, total_blocks - 1), 0)

    kernel = functools.partial(
        _iou_partial_kernel,
        true_rows=rows,
        block_rows=block_rows,
        chunk_rows=chunk_rows,
        steps_per_split=steps,
    )

    partials = pl.pallas_call(
        kernel,
        out_shape=jax.ShapeDtypeStruct((num_splits, 2, _LANES), jnp.float32),
        grid_spec=pltpu.PrefetchScalarGridSpec(
            num_scalar_prefetch=0,
            grid=(num_splits, steps),
            in_specs=[
                pl.BlockSpec((block_rows, _LANES), in_index),
                pl.BlockSpec((block_rows, _LANES), in_index),
            ],
            out_specs=pl.BlockSpec((1, 2, _LANES), lambda s, i: (s, 0, 0)),
            scratch_shapes=[
                pltpu.VMEM((chunk_rows, _LANES), jnp.float32),
                pltpu.VMEM((chunk_rows, _LANES), jnp.float32),
            ],
        ),
        compiler_params=pltpu.CompilerParams(
            # TODO(synk): evaluate pltpu.CORE_PARALLEL on axis 0 for v7x once
            # verified safe on 1-TC chips; "parallel" is the portable hint.
            dimension_semantics=("parallel", "arbitrary"),
            # 2 inputs x 2 buffers x 4 MiB blocks + tiny accumulators ~= 16 MiB.
            vmem_limit_bytes=32 * 1024 * 1024,
        ),
    )(x2, y2)

    # Tiny final combine over (num_splits, 128) lane partials + ragged tail.
    inter = jnp.sum(partials[:, 0, :]) + tail_inter
    total = jnp.sum(partials[:, 1, :]) + tail_total
    union = total - inter
    return 1.0 - (inter + smooth) / (union + smooth)


def _reference_iou_loss(inputs, targets, smooth=1.0):
    x = jnp.ravel(inputs).astype(jnp.float32)
    y = jnp.ravel(targets).astype(jnp.float32)
    inter = jnp.sum(x * y)
    total = jnp.sum(x + y)
    union = total - inter
    return 1.0 - (inter + smooth) / (union + smooth)


if __name__ == "__main__":
    key = jax.random.PRNGKey(0)

    # Shapes consistent with a 4-channel segmentation output (NCHW); the extra
    # cases exercise the masked ragged-tail block, the <128-element lane tail,
    # and the multi-block / two-split streaming path with a clamped duplicate.
    shapes = [
        (2, 4, 16, 16),     # small: one block, one split
        (2, 4, 128, 144),   # medium: single full-extent block, chunked reduce
        (2, 4, 17, 19),     # n % 128 != 0: wrapper tail + masked last block
        (2, 4, 512, 520),   # 3 blocks, 2 splits: steady state + mask + dup clamp
    ]
    for idx, shape in enumerate(shapes):
        k1, k2 = jax.random.split(jax.random.fold_in(key, idx))
        inputs = jax.nn.sigmoid(jax.random.normal(k1, shape, dtype=jnp.float32))
        targets = (jax.random.uniform(k2, shape) > 0.5).astype(jnp.float32)

        loss = jax.block_until_ready(iou_loss(inputs, targets, smooth=1.0))
        ref = jax.block_until_ready(_reference_iou_loss(inputs, targets, smooth=1.0))
        assert jnp.allclose(loss, ref, rtol=1e-5, atol=1e-5), (shape, loss, ref)

    print("KERNEL_OK")
</pallas_src>

<mosaic_0001>
module attributes {stable_mosaic.version = 11 : i64} {
  func.func @_iou_partial_kernel(%arg0: i32, %arg1: i32, %arg2: memref<16x128xf32, #tpu.memory_space<vmem>>, %arg3: memref<16x128xf32, #tpu.memory_space<vmem>>, %arg4: memref<1x2x128xf32, #tpu.memory_space<vmem>>, %arg5: memref<8x128xf32, #tpu.memory_space<vmem>>, %arg6: memref<8x128xf32, #tpu.memory_space<vmem>>) attributes {dimension_semantics = [#tpu.dimension_semantics<parallel>, #tpu.dimension_semantics<arbitrary>], iteration_bounds = array<i64: 1, 1>, scalar_prefetch = 0 : i64, scratch_operands = 2 : i64, tpu.core_type = #tpu.core_type<tc>, window_params = [{transform_indices = @transform_0, window_bounds = array<i64: 16, 128>}, {transform_indices = @transform_1, window_bounds = array<i64: 16, 128>}, {transform_indices = @transform_2, window_bounds = array<i64: 1, 2, 128>}]} {
    %c0_i32 = arith.constant 0 : i32
    %0 = arith.cmpi eq, %arg1, %c0_i32 : i32
    %1 = arith.extui %0 : i1 to i32
    %c0_i32_0 = arith.constant 0 : i32
    %2 = arith.cmpi ne, %1, %c0_i32_0 : i32
    scf.if %2 {
      %cst = arith.constant 0.000000e+00 : f32
      %16 = vector.broadcast %cst : f32 to vector<8x128xf32>
      %c0 = arith.constant 0 : index
      %c0_7 = arith.constant 0 : index
      %17 = vector.load %arg5[%c0, %c0_7] : memref<8x128xf32, #tpu.memory_space<vmem>>, vector<8x128xf32>
      tpu.vector_store %arg5[%c0, %c0_7], %16 {strides = array<i32>} : memref<8x128xf32, #tpu.memory_space<vmem>>, vector<8x128xf32>,
      %cst_8 = arith.constant 0.000000e+00 : f32
      %18 = vector.broadcast %cst_8 : f32 to vector<8x128xf32>
      %c0_9 = arith.constant 0 : index
      %c0_10 = arith.constant 0 : index
      %19 = vector.load %arg6[%c0_9, %c0_10] : memref<8x128xf32, #tpu.memory_space<vmem>>, vector<8x128xf32>
      tpu.vector_store %arg6[%c0_9, %c0_10], %18 {strides = array<i32>} : memref<8x128xf32, #tpu.memory_space<vmem>>, vector<8x128xf32>,
    } else {
    }
    %c1_i32 = arith.constant 1 : i32
    %3 = arith.muli %arg0, %c1_i32 : i32
    %4 = arith.addi %3, %arg1 : i32
    %c16_i32 = arith.constant 16 : i32
    %5 = arith.muli %4, %c16_i32 : i32
    %c16_i32_1 = arith.constant 16 : i32
    %6 = arith.addi %5, %c16_i32_1 : i32
    %c16_i32_2 = arith.constant 16 : i32
    %7 = arith.cmpi sgt, %6, %c16_i32_2 : i32
    %true = arith.constant true
    %8 = arith.xori %7, %true : i1
    %9 = arith.extui %8 : i1 to i32
    %c0_i32_3 = arith.constant 0 : i32
    %10 = arith.cmpi ne, %9, %c0_i32_3 : i32
    scf.if %10 {
      %cst = arith.constant 0.000000e+00 : f32
      %16 = vector.broadcast %cst : f32 to vector<8x128xf32>
      %c0_i32_7 = arith.constant 0 : i32
      %c2_i32 = arith.constant 2 : i32
      %17 = arith.addi %c0_i32_7, %c2_i32 : i32
      %c1_i32_8 = arith.constant 1 : i32
      %18:2 = scf.for %arg7 = %c0_i32_7 to %17 step %c1_i32_8 iter_args(%arg8 = %16, %arg9 = %16) -> (vector<8x128xf32>, vector<8x128xf32>)  : i32 {
        %c8_i32 = arith.constant 8 : i32
        %25 = arith.muli %arg7, %c8_i32 : i32
        %26 = tpu.assume_multiple %25, 8 : i32
        %27 = arith.index_cast %26 : i32 to index
        %c0_17 = arith.constant 0 : index
        %28 = vector.load %arg2[%27, %c0_17] : memref<16x128xf32, #tpu.memory_space<vmem>>, vector<8x128xf32>
        %29 = arith.index_cast %26 : i32 to index
        %c0_18 = arith.constant 0 : index
        %30 = vector.load %arg3[%29, %c0_18] : memref<16x128xf32, #tpu.memory_space<vmem>>, vector<8x128xf32>
        %31 = arith.mulf %28, %30 : vector<8x128xf32>
        %32 = arith.addf %arg8, %31 : vector<8x128xf32>
        %33 = arith.addf %28, %30 : vector<8x128xf32>
        %34 = arith.addf %arg9, %33 : vector<8x128xf32>
        scf.yield %32, %34 : vector<8x128xf32>, vector<8x128xf32>
      }
      %c2_i32_9 = arith.constant 2 : i32
      %c0 = arith.constant 0 : index
      %c0_10 = arith.constant 0 : index
      %19 = vector.load %arg5[%c0, %c0_10] : memref<8x128xf32, #tpu.memory_space<vmem>>, vector<8x128xf32>
      %20 = arith.addf %19, %18#0 : vector<8x128xf32>
      %c0_11 = arith.constant 0 : index
      %c0_12 = arith.constant 0 : index
      %21 = vector.load %arg5[%c0_11, %c0_12] : memref<8x128xf32, #tpu.memory_space<vmem>>, vector<8x128xf32>
      tpu.vector_store %arg5[%c0_11, %c0_12], %20 {strides = array<i32>} : memref<8x128xf32, #tpu.memory_space<vmem>>, vector<8x128xf32>,
      %c0_13 = arith.constant 0 : index
      %c0_14 = arith.constant 0 : index
      %22 = vector.load %arg6[%c0_13, %c0_14] : memref<8x128xf32, #tpu.memory_space<vmem>>, vector<8x128xf32>
      %23 = arith.addf %22, %18#1 : vector<8x128xf32>
      %c0_15 = arith.constant 0 : index
      %c0_16 = arith.constant 0 : index
      %24 = vector.load %arg6[%c0_15, %c0_16] : memref<8x128xf32, #tpu.memory_space<vmem>>, vector<8x128xf32>
      tpu.vector_store %arg6[%c0_15, %c0_16], %23 {strides = array<i32>} : memref<8x128xf32, #tpu.memory_space<vmem>>, vector<8x128xf32>,
    } else {
    }
    %11 = arith.extui %7 : i1 to i32
    %c0_i32_4 = arith.constant 0 : i32
    %12 = arith.cmpi ne, %11, %c0_i32_4 : i32
    scf.if %12 {
      %cst = arith.constant 0.000000e+00 : f32
      %16 = vector.broadcast %cst : f32 to vector<8x128xf32>
      %c0_i32_7 = arith.constant 0 : i32
      %c2_i32 = arith.constant 2 : i32
      %17 = arith.addi %c0_i32_7, %c2_i32 : i32
      %c1_i32_8 = arith.constant 1 : i32
      %18:2 = scf.for %arg7 = %c0_i32_7 to %17 step %c1_i32_8 iter_args(%arg8 = %16, %arg9 = %16) -> (vector<8x128xf32>, vector<8x128xf32>)  : i32 {
        %c8_i32 = arith.constant 8 : i32
        %25 = arith.muli %arg7, %c8_i32 : i32
        %26 = tpu.assume_multiple %25, 8 : i32
        %27 = arith.index_cast %26 : i32 to index
        %c0_17 = arith.constant 0 : index
        %28 = vector.load %arg2[%27, %c0_17] : memref<16x128xf32, #tpu.memory_space<vmem>>, vector<8x128xf32>
        %29 = arith.index_cast %26 : i32 to index
        %c0_18 = arith.constant 0 : index
        %30 = vector.load %arg3[%29, %c0_18] : memref<16x128xf32, #tpu.memory_space<vmem>>, vector<8x128xf32>
        %31 = tpu.iota {dimensions = array<i32: 0>} : vector<8x128xi32>
        %32 = arith.addi %5, %26 : i32
        %33 = vector.broadcast %32 : i32 to vector<8x128xi32>
        %34 = arith.addi %33, %31 : vector<8x128xi32>
        %c16_i32_19 = arith.constant 16 : i32
        %35 = vector.broadcast %c16_i32_19 : i32 to vector<8x128xi32>
        %36 = arith.cmpi slt, %34, %35 : vector<8x128xi32>
        %cst_20 = arith.constant 0.000000e+00 : f32
        %37 = vector.broadcast %cst_20 : f32 to vector<8x128xf32>
        %38 = arith.select %36, %28, %37 : vector<8x128xi1>, vector<8x128xf32>
        %cst_21 = arith.constant 0.000000e+00 : f32
        %39 = vector.broadcast %cst_21 : f32 to vector<8x128xf32>
        %40 = arith.select %36, %30, %39 : vector<8x128xi1>, vector<8x128xf32>
        %41 = arith.mulf %38, %40 : vector<8x128xf32>
        %42 = arith.addf %arg8, %41 : vector<8x128xf32>
        %43 = arith.addf %38, %40 : vector<8x128xf32>
        %44 = arith.addf %arg9, %43 : vector<8x128xf32>
        scf.yield %42, %44 : vector<8x128xf32>, vector<8x128xf32>
      }
      %c2_i32_9 = arith.constant 2 : i32
      %c0 = arith.constant 0 : index
      %c0_10 = arith.constant 0 : index
      %19 = vector.load %arg5[%c0, %c0_10] : memref<8x128xf32, #tpu.memory_space<vmem>>, vector<8x128xf32>
      %20 = arith.addf %19, %18#0 : vector<8x128xf32>
      %c0_11 = arith.constant 0 : index
      %c0_12 = arith.constant 0 : index
      %21 = vector.load %arg5[%c0_11, %c0_12] : memref<8x128xf32, #tpu.memory_space<vmem>>, vector<8x128xf32>
      tpu.vector_store %arg5[%c0_11, %c0_12], %20 {strides = array<i32>} : memref<8x128xf32, #tpu.memory_space<vmem>>, vector<8x128xf32>,
      %c0_13 = arith.constant 0 : index
      %c0_14 = arith.constant 0 : index
      %22 = vector.load %arg6[%c0_13, %c0_14] : memref<8x128xf32, #tpu.memory_space<vmem>>, vector<8x128xf32>
      %23 = arith.addf %22, %18#1 : vector<8x128xf32>
      %c0_15 = arith.constant 0 : index
      %c0_16 = arith.constant 0 : index
      %24 = vector.load %arg6[%c0_15, %c0_16] : memref<8x128xf32, #tpu.memory_space<vmem>>, vector<8x128xf32>
      tpu.vector_store %arg6[%c0_15, %c0_16], %23 {strides = array<i32>} : memref<8x128xf32, #tpu.memory_space<vmem>>, vector<8x128xf32>,
    } else {
    }
    %c0_i32_5 = arith.constant 0 : i32
    %13 = arith.cmpi eq, %arg1, %c0_i32_5 : i32
    %14 = arith.extui %13 : i1 to i32
    %c0_i32_6 = arith.constant 0 : i32
    %15 = arith.cmpi ne, %14, %c0_i32_6 : i32
    scf.if %15 {
      %c0 = arith.constant 0 : index
      %c0_7 = arith.constant 0 : index
      %16 = vector.load %arg5[%c0, %c0_7] : memref<8x128xf32, #tpu.memory_space<vmem>>, vector<8x128xf32>
      %cst = arith.constant dense<0.000000e+00> : vector<128xf32>
      %17 = vector.multi_reduction <add>, %16, %cst [0] : vector<8x128xf32> to vector<128xf32>
      %18 = vector.shape_cast %17 : vector<128xf32> to vector<1x128xf32>
      %c0_8 = arith.constant 0 : index
      %c0_9 = arith.constant 0 : index
      %19 = vector.load %arg6[%c0_8, %c0_9] : memref<8x128xf32, #tpu.memory_space<vmem>>, vector<8x128xf32>
      %cst_10 = arith.constant dense<0.000000e+00> : vector<128xf32>
      %20 = vector.multi_reduction <add>, %19, %cst_10 [0] : vector<8x128xf32> to vector<128xf32>
      %21 = vector.shape_cast %20 : vector<128xf32> to vector<1x128xf32>
      %22 = vector.shape_cast %18 : vector<1x128xf32> to vector<1x1x128xf32>
      %c0_11 = arith.constant 0 : index
      %c0_12 = arith.constant 0 : index
      %c0_13 = arith.constant 0 : index
      %23 = vector.load %arg4[%c0_11, %c0_12, %c0_13] : memref<1x2x128xf32, #tpu.memory_space<vmem>>, vector<1x1x128xf32>
      tpu.vector_store %arg4[%c0_11, %c0_12, %c0_13], %22 {strides = array<i32>} : memref<1x2x128xf32, #tpu.memory_space<vmem>>, vector<1x1x128xf32>,
      %24 = vector.shape_cast %21 : vector<1x128xf32> to vector<1x1x128xf32>
      %c0_14 = arith.constant 0 : index
      %c1 = arith.constant 1 : index
      %c0_15 = arith.constant 0 : index
      %25 = vector.load %arg4[%c0_14, %c1, %c0_15] : memref<1x2x128xf32, #tpu.memory_space<vmem>>, vector<1x1x128xf32>
      tpu.vector_store %arg4[%c0_14, %c1, %c0_15], %24 {strides = array<i32>} : memref<1x2x128xf32, #tpu.memory_space<vmem>>, vector<1x1x128xf32>,
    } else {
    }
    return
  }
  func.func @transform_0(%arg0: i32, %arg1: i32) -> (i32, i32) {
    %c1_i32 = arith.constant 1 : i32
    %0 = arith.muli %arg0, %c1_i32 : i32
    %1 = arith.addi %0, %arg1 : i32
    %c0_i32 = arith.constant 0 : i32
    %2 = arith.minsi %1, %c0_i32 : i32
    %c0_i32_0 = arith.constant 0 : i32
    %c0_i32_1 = arith.constant 0 : i32
    return %2, %c0_i32_0 : i32, i32
  }
  func.func @transform_1(%arg0: i32, %arg1: i32) -> (i32, i32) {
    %c1_i32 = arith.constant 1 : i32
    %0 = arith.muli %arg0, %c1_i32 : i32
    %1 = arith.addi %0, %arg1 : i32
    %c0_i32 = arith.constant 0 : i32
    %2 = arith.minsi %1, %c0_i32 : i32
    %c0_i32_0 = arith.constant 0 : i32
    %c0_i32_1 = arith.constant 0 : i32
    return %2, %c0_i32_0 : i32, i32
  }
  func.func @transform_2(%arg0: i32, %arg1: i32) -> (i32, i32, i32) {
    %c0_i32 = arith.constant 0 : i32
    %c0_i32_0 = arith.constant 0 : i32
    %c0_i32_1 = arith.constant 0 : i32
    return %arg0, %c0_i32, %c0_i32_0 : i32, i32, i32
  }
}

</mosaic_0001>

<llo_original>
// kernel: tpu_custom_call.1
$region0: #{tpu_custom_call.1}
  #allocation0 [shape = 'u32[]', space=smem, size = 0x4, offset = 0x4, fixed_abs, tag = 'smem constant byte address 0x4 - core index']
  #allocation1 [shape = 'u32[144,128]{1,0:T(1,128)}', space=vmem, size = 0x12000, scoped, tag = 'internal scratch']
  #allocation2 [shape = 'f32[8,128]{1,0:T(8,128)}', space=vmem, size = 0x1000, scoped, tag = 'scratch operand']
  #allocation3 [shape = 'f32[8,128]{1,0:T(8,128)}', space=vmem, size = 0x1000, scoped, tag = 'scratch operand']
  %s0 = inlined_call_operand.hbm [shape: f32[16,128], index: 0, kind: input, shape index: {}]
  %s1 = inlined_call_operand.hbm [shape: f32[16,128], index: 1, kind: input, shape index: {}]
  %s2 = inlined_call_operand.hbm [shape: f32[1,2,128], index: 2, kind: output, shape index: {}]
  %s3 = sld [smem:[#allocation0]]
  $region56: #{tpu_custom_call.1} parent=0
    _
  %s5 = ssub.s32 1, %s3
  %s6 = scalar_select 0, %s5, %s3
  $region1: #{tpu_custom_call.1} parent=0
    #allocation4 [shape = 'u8[8192]{0}', space=vmem, size = 0x2000, scoped, tag = 'input window, operand 0, single buffered']
    #allocation5 [shape = 's32[1]{0}', space=sflag, size = 0x4, scoped, tag = 'scoped memory for tpu_custom_call.1']
    #allocation6 [shape = 's32[1]{0}', space=sflag, size = 0x4, scoped, tag = 'scoped memory for tpu_custom_call.1']
    #allocation7 [shape = 'u8[8192]{0}', space=vmem, size = 0x2000, scoped, tag = 'input window, operand 1, single buffered']
    #allocation8 [shape = 's32[1]{0}', space=sflag, size = 0x4, scoped, tag = 'scoped memory for tpu_custom_call.1']
    #allocation9 [shape = 'u8[1024]{0}', space=vmem, size = 0x400, scoped, tag = 'output window, operand 0, single buffered']
    %7 = vsyncpa [#allocation5], 0
    %8 = vsyncpa [#allocation8], 0
    %9 = vsyncpa [#allocation6], 0
    // Predicated region
    $region2: #{tpu_custom_call.1} parent=1 // pred_check
      _
    $region3: #{tpu_custom_call.1} parent=1 // pred_check_branch
      %11 = sbr.rel (0) target = $region5
    $region4: #{tpu_custom_call.1} parent=1 // pred_region
      %s12 = sadd.s32 0, 0
      %p13 = scmp.lt.s32.totalorder %s12, 0
      %s14 = scalar_select %p13, %s12, 0
      %s15 = smul.u32 2, %s14
      %s17 = ssub.s32 256, 256
      %18 = vsyncadd [#allocation5], %s17
      %s19 = smul.addr %s15, 128
      %s20 = scalar_lea.hbm %s0, %s19
      %s21 = sshll.u32 [#allocation4], 4
      %s22 = int_to_ptr.vmem [resolvable:$true] %s21
      %27 = dma.hbm_to_vmem [thread:$0]  %s20, 256, %s22, [#allocation5], 128, 128, 8
    $region5: #{tpu_custom_call.1} parent=1 // pred_fallthru
      _
    // Predicated region
    $region6: #{tpu_custom_call.1} parent=1 // pred_check
      _
    $region7: #{tpu_custom_call.1} parent=1 // pred_check_branch
      %29 = sbr.rel (0) target = $region9
    $region8: #{tpu_custom_call.1} parent=1 // pred_region
      %s30 = sadd.s32 0, 0
      %p31 = scmp.lt.s32.totalorder %s30, 0
      %s32 = scalar_select %p31, %s30, 0
      %s33 = smul.u32 2, %s32
      %s35 = ssub.s32 256, 256
      %36 = vsyncadd [#allocation8], %s35
      %s37 = smul.addr %s33, 128
      %s38 = scalar_lea.hbm %s1, %s37
      %s39 = sshll.u32 [#allocation7], 4
      %s40 = int_to_ptr.vmem [resolvable:$true] %s39
      %45 = dma.hbm_to_vmem [thread:$0]  %s38, 256, %s40, [#allocation8], 128, 128, 8
    $region9: #{tpu_custom_call.1} parent=1 // pred_fallthru
      _
    // Predicated region
    $region10: #{tpu_custom_call.1} parent=1 // pred_check
      _
    $region11: #{tpu_custom_call.1} parent=1 // pred_check_branch
      %47 = sbr.rel (0) target = $region13
    $region12: #{tpu_custom_call.1} parent=1 // pred_region
      %48 = dma.done [#allocation5], 256
    $region13: #{tpu_custom_call.1} parent=1 // pred_fallthru
      _
    // Predicated region
    $region14: #{tpu_custom_call.1} parent=1 // pred_check
      _
    $region15: #{tpu_custom_call.1} parent=1 // pred_check_branch
      %50 = sbr.rel (0) target = $region17
    $region16: #{tpu_custom_call.1} parent=1 // pred_region
      %51 = dma.done [#allocation8], 256
    $region17: #{tpu_custom_call.1} parent=1 // pred_fallthru
      _
    %s52 = sadd.s32 0, 0
    %p53 = scmp.lt.s32.totalorder %s52, 0
    %s54 = scalar_select %p53, %s52, 0
    %s55 = smul.u32 2, %s54
    %s56 = sadd.s32 0, 0
    %p57 = scmp.lt.s32.totalorder %s56, 0
    %s58 = scalar_select %p57, %s56, 0
    %s59 = smul.u32 2, %s58
    %p60 = scmp.eq.s32.totalorder 0, 0
    // Predicated region
    $region18: #{tpu_custom_call.1} parent=1 // pred_check
      %p61 = pneg %p60
    $region19: #{tpu_custom_call.1} parent=1 // pred_check_branch
      %63 = sbr.rel (%p61) target = $region21
    $region20: #{tpu_custom_call.1} parent=1 // pred_region
      %64 = vst [vmem:[#allocation2] sm:$0xff] 0.0
      %65 = vst [vmem:[#allocation3] sm:$0xff] 0.0
    $region21: #{tpu_custom_call.1} parent=1 // pred_fallthru
      _
    %s66 = sadd.s32 0, 0
    %s67 = smul.u32 %s66, 16
    %s68 = sadd.s32 %s67, 16
    %p69 = scmp.gt.s32.totalorder %s68, 16
    %p70 = scmp.le.s32.totalorder %s68, 16
    // Predicated region
    $region22: #{tpu_custom_call.1} parent=1 // pred_check
      %p71 = pneg %p70
    $region23: #{tpu_custom_call.1} parent=1 // pred_check_branch
      %73 = sbr.rel (%p71) target = $region25
    $region24: #{tpu_custom_call.1} parent=1 // pred_region
      loop: start=0, step=1, limit=2
      $region26: #{tpu_custom_call.1} parent=24 // loop_pre_header
        _
      $region27: #{tpu_custom_call.1} parent=24 // loop_header
        %s75 = sphi 0, %s79
        %p76 = scmp.ge.s32.totalorder %s75, 2
        %v80 = vphi 0.0, %v88
        %v81 = vphi 0.0, %v90
      $region28: #{tpu_custom_call.1} parent=24 // loop_header_branch
        %78 = sbr.rel (%p76) target = $region32
      $region29: #{tpu_custom_call.1} parent=24 // loop_body
        %s82 = smul.u32 %s75, 8
        %s83 = scalar_lea.vmem [#allocation4], %s82
        %v84 = vld [vmem:[%s83] sm:$0xff]
        %s85 = scalar_lea.vmem [#allocation7], %s82
        %v86 = vld [vmem:[%s85] sm:$0xff]
        %v87 = vmul.f32 %v84, %v86
        %v88 = vadd.f32 %v80, %v87
        %v89 = vadd.f32 %v84, %v86
        %v90 = vadd.f32 %v81, %v89
      $region30: #{tpu_custom_call.1} parent=24 // loop_footer
        %s79 = sadd.s32 1, %s75
      $region31: #{tpu_custom_call.1} parent=24 // loop_footer_branch
        %74 = sbr.rel target = $region27
      $region32: #{tpu_custom_call.1} parent=24 // loop_exit
        _
      %v91 = vld [vmem:[#allocation2] sm:$0xff]
      %v92 = vadd.f32 %v91, %v80
      %93 = vst [vmem:[#allocation2] sm:$0xff] %v92
      %v94 = vld [vmem:[#allocation3] sm:$0xff]
      %v95 = vadd.f32 %v94, %v81
      %96 = vst [vmem:[#allocation3] sm:$0xff] %v95
    $region25: #{tpu_custom_call.1} parent=1 // pred_fallthru
      _
    // Predicated region
    $region33: #{tpu_custom_call.1} parent=1 // pred_check
      %p97 = pneg %p69
    $region34: #{tpu_custom_call.1} parent=1 // pred_check_branch
      %99 = sbr.rel (%p97) target = $region36
    $region35: #{tpu_custom_call.1} parent=1 // pred_region
      loop: start=0, step=1, limit=2
      $region37: #{tpu_custom_call.1} parent=35 // loop_pre_header
        _
      $region38: #{tpu_custom_call.1} parent=35 // loop_header
        %s101 = sphi 0, %s105
        %p102 = scmp.ge.s32.totalorder %s101, 2
        %v106 = vphi 0.0, %v122
        %v107 = vphi 0.0, %v124
      $region39: #{tpu_custom_call.1} parent=35 // loop_header_branch
        %104 = sbr.rel (%p102) target = $region43
      $region40: #{tpu_custom_call.1} parent=35 // loop_body
        %s108 = smul.u32 %s101, 8
        %s109 = scalar_lea.vmem [#allocation4], %s108
        %v110 = vld [vmem:[%s109] sm:$0xff]
        %s111 = scalar_lea.vmem [#allocation7], %s108
        %v112 = vld [vmem:[%s111] sm:$0xff]
        %v113 = vlaneseq
        %v114 = vshrl.u32 %v113, 7
        %s115 = sadd.s32 %s67, %s108
        %v116 = vstv %s115
        %v117 = vadd.s32 %v116, %v114
        %vm118 = vcmp.lt.s32.totalorder %v117, 16
        %v119 = vsel %vm118, %v110, 0.0
        %v120 = vsel %vm118, %v112, 0.0
        %v121 = vmul.f32 %v119, %v120
        %v122 = vadd.f32 %v106, %v121
        %v123 = vadd.f32 %v119, %v120
        %v124 = vadd.f32 %v107, %v123
      $region41: #{tpu_custom_call.1} parent=35 // loop_footer
        %s105 = sadd.s32 1, %s101
      $region42: #{tpu_custom_call.1} parent=35 // loop_footer_branch
        %100 = sbr.rel target = $region38
      $region43: #{tpu_custom_call.1} parent=35 // loop_exit
        _
      %v125 = vld [vmem:[#allocation2] sm:$0xff]
      %v126 = vadd.f32 %v125, %v106
      %127 = vst [vmem:[#allocation2] sm:$0xff] %v126
      %v128 = vld [vmem:[#allocation3] sm:$0xff]
      %v129 = vadd.f32 %v128, %v107
      %130 = vst [vmem:[#allocation3] sm:$0xff] %v129
    $region36: #{tpu_custom_call.1} parent=1 // pred_fallthru
      _
    // Predicated region
    $region44: #{tpu_custom_call.1} parent=1 // pred_check
      %p131 = pneg %p60
    $region45: #{tpu_custom_call.1} parent=1 // pred_check_branch
      %133 = sbr.rel (%p131) target = $region47
    $region46: #{tpu_custom_call.1} parent=1 // pred_region
      %v134 = vld [vmem:[#allocation2] sm:$0xff]
      %v135 = vrot.slane %v134, 4
      %v136 = vadd.f32 %v134, %v135
      %v137 = vrot.slane %v136, 2
      %v138 = vadd.f32 %v136, %v137
      %v139 = vrot.slane %v138, 1
      %v140 = vadd.f32 %v138, %v139
      %v141 = vld [vmem:[#allocation3] sm:$0xff]
      %v142 = vrot.slane %v141, 4
      %v143 = vadd.f32 %v141, %v142
      %v144 = vrot.slane %v143, 2
      %v145 = vadd.f32 %v143, %v144
      %v146 = vrot.slane %v145, 1
      %v147 = vadd.f32 %v145, %v146
      %148 = vst [vmem:[#allocation9] sm:$0x1] %v140
      %149 = vst [vmem:[#allocation9 + $0x1] sm:$0x1] %v147
    $region47: #{tpu_custom_call.1} parent=1 // pred_fallthru
      _
    // Predicated region
    $region48: #{tpu_custom_call.1} parent=1 // pred_check
      _
    $region49: #{tpu_custom_call.1} parent=1 // pred_check_branch
      %151 = sbr.rel (0) target = $region51
    $region50: #{tpu_custom_call.1} parent=1 // pred_region
      %s153 = ssub.s32 32, 32
      %154 = vsyncadd [#allocation6], %s153
      %s156 = sshll.u32 [#allocation9], 4
      %s157 = int_to_ptr.vmem [resolvable:$true] %s156
      %159 = dma.vmem_to_hbm [thread:$0]  %s157, 32, %s2, [#allocation6]
    $region51: #{tpu_custom_call.1} parent=1 // pred_fallthru
      _
    // Predicated region
    $region52: #{tpu_custom_call.1} parent=1 // pred_check
      _
    $region53: #{tpu_custom_call.1} parent=1 // pred_check_branch
      %161 = sbr.rel (0) target = $region55
    $region54: #{tpu_custom_call.1} parent=1 // pred_region
      %162 = dma.done [#allocation6], 32
    $region55: #{tpu_custom_call.1} parent=1 // pred_fallthru
      _
    %163 = vsyncpa [#allocation5], 1
    %164 = vsyncpa [#allocation8], 1
    %165 = vsyncpa [#allocation6], 1

</llo_original>
